<compile_context>
chip_gen: v6e
topology: v6e:2x2x1
jax: 0.10.0
libtpu: 0.0.40
codegen_flags: <defaults>
</compile_context>

<pallas_src>
import jax
import jax.numpy as jnp
from jax.experimental import pallas as pl
from jax.experimental.pallas import tpu as pltpu


def _round_up(x, m):
    return -(-x // m) * m


def _cdiv(a, b):
    return -(-a // b)


def _bspec(shape, index_map, buffers=None):
    """BlockSpec helper; `buffers=1` single-buffers a (near-)constant operand."""
    if buffers is None:
        return pl.BlockSpec(shape, index_map)
    try:
        return pl.BlockSpec(shape, index_map, pipeline_mode=pl.Buffered(buffers))
    except TypeError:  # older jax without pipeline_mode kwarg — degrade gracefully
        return pl.BlockSpec(shape, index_map)


# ----------------------------------------------------------------------------
# Kernels
# ----------------------------------------------------------------------------
def _qkv_folded_kernel(x_ref, w_ref, b_ref, out_ref):
    # x_ref: (tm, C) ; w_ref: (C, tn) with LoRA already folded ; b_ref: (1, tn) f32
    acc = jnp.dot(x_ref[...], w_ref[...], preferred_element_type=jnp.float32)
    out_ref[...] = (acc + b_ref[...].astype(jnp.float32)).astype(out_ref.dtype)


def _qkv_lora_fused_kernel(x_ref, w_ref, b_ref, a_ref, bqv_ref, out_ref, h_ref):
    # x_ref: (tm, C); w_ref: (C, tn); b_ref: (1, tn) f32
    # a_ref: (C, 2r) = [A_q | A_v]; bqv_ref: (2r, tn) block-structured B
    # h_ref: (tm, 2r) f32 VMEM scratch, persists across the inner N sweep.
    @pl.when(pl.program_id(1) == 0)
    def _():
        # Depends only on the row tile -> compute once per row tile.
        h_ref[...] = jnp.dot(x_ref[...], a_ref[...],
                             preferred_element_type=jnp.float32)

    acc = jnp.dot(x_ref[...], w_ref[...], preferred_element_type=jnp.float32)
    delta = jnp.dot(h_ref[...].astype(bqv_ref.dtype), bqv_ref[...],
                    preferred_element_type=jnp.float32)
    out_ref[...] = (acc + b_ref[...].astype(jnp.float32) + delta).astype(out_ref.dtype)


# ----------------------------------------------------------------------------
# Wrappers
# ----------------------------------------------------------------------------
def fold_lora_weights(w_qkv, w_a_q, w_b_q, w_a_v, w_b_v, *, dtype=None):
    """Fold the LoRA adapters into the base qkv weight.

    Do this ONCE at weight-load time (not per forward call) — it reads/writes
    the full (C, 3C) weight.  The fold is done in f32 and cast once at the end.
    """
    C = w_qkv.shape[0]
    w = w_qkv.astype(jnp.float32)
    w = w.at[:, :C].add(
        jnp.dot(w_a_q.astype(jnp.float32), w_b_q.astype(jnp.float32)))
    w = w.at[:, 2 * C:].add(
        jnp.dot(w_a_v.astype(jnp.float32), w_b_v.astype(jnp.float32)))
    return w.astype(dtype if dtype is not None else w_qkv.dtype)


def lora_qkv(x, w_qkv, b_qkv, w_a_q, w_b_q, w_a_v, w_b_v, *,
             w_eff=None, fold_lora=True, tm=512, tn=None,
             compute_dtype=jnp.bfloat16, out_dtype=None,
             vmem_limit_bytes=48 * 1024 * 1024):
    """x: (B, H, W, C).  Weights stored transposed vs. PyTorch (out, in):
    w_qkv (C, 3C), w_a_* (C, r), w_b_* (r, C).

    fold_lora=True (inference default): the rank-r adapters are folded into the
    base weight (pass a precomputed `w_eff` from fold_lora_weights to avoid
    redoing the fold every call) and the kernel is a single GEMM + bias.
    fold_lora=False: adapters stay live in-kernel (fused A/B stages)."""
    B, H, W, C = x.shape
    r = w_a_q.shape[1]
    N = 3 * C
    M = B * H * W

    # Balanced row tiles: pad at most ~7 rows per tile instead of up to tm-1.
    tm = max(8, min(tm, _round_up(M, 8)))
    num_m = _cdiv(M, tm)
    tm = _round_up(_cdiv(M, num_m), 8)
    M_pad = num_m * tm

    # Optional N tiling — only useful for very large C on small-VMEM parts.
    if tn is None or tn >= N:
        tn = N
    else:
        assert N % tn == 0 and tn % 128 == 0, "tn must be a 128-aligned divisor of 3C"
    num_n = N // tn

    out_dtype = compute_dtype if out_dtype is None else out_dtype
    out_isize = jnp.dtype(out_dtype).itemsize

    x2d = x.reshape(M, C).astype(compute_dtype)
    if M_pad > M:
        x2d = jnp.pad(x2d, ((0, M_pad - M), (0, 0)))
    b2d = b_qkv.reshape(1, N).astype(jnp.float32)  # bias added in the f32 epilogue

    cparams = dict(vmem_limit_bytes=vmem_limit_bytes)

    if fold_lora:
        if w_eff is None:
            # NOTE: precompute once with fold_lora_weights() and pass it in to
            # avoid re-reading/re-writing the full (C, 3C) weight every call.
            w_eff = fold_lora_weights(w_qkv, w_a_q, w_b_q, w_a_v, w_b_v,
                                      dtype=compute_dtype)
        else:
            w_eff = w_eff.astype(compute_dtype)

        flops = 2 * M_pad * C * N
        bytes_accessed = (x2d.size * x2d.dtype.itemsize
                          + w_eff.size * w_eff.dtype.itemsize
                          + b2d.size * b2d.dtype.itemsize
                          + M_pad * N * out_isize)

        if num_n == 1:
            # Full weight resident (constant index_map -> DMA'd once).
            grid = (num_m,)
            dims = ("parallel",)
            x_spec = _bspec((tm, C), lambda i: (i, 0))
            w_spec = _bspec((C, tn), lambda i: (0, 0), buffers=1)
            b_spec = _bspec((1, tn), lambda i: (0, 0), buffers=1)
            o_spec = _bspec((tm, tn), lambda i: (i, 0))
        else:
            # N outer / M inner: the weight block is constant along the inner
            # sweep -> streamed from HBM once per column tile, not per row tile.
            grid = (num_n, num_m)
            dims = ("parallel", "parallel")
            x_spec = _bspec((tm, C), lambda j, i: (i, 0))
            w_spec = _bspec((C, tn), lambda j, i: (0, j), buffers=1)
            b_spec = _bspec((1, tn), lambda j, i: (0, j), buffers=1)
            o_spec = _bspec((tm, tn), lambda j, i: (i, j))

        out2d = pl.pallas_call(
            _qkv_folded_kernel,
            out_shape=jax.ShapeDtypeStruct((M_pad, N), out_dtype),
            grid_spec=pltpu.PrefetchScalarGridSpec(
                num_scalar_prefetch=0, grid=grid,
                in_specs=[x_spec, w_spec, b_spec],
                out_specs=o_spec),
            compiler_params=pltpu.CompilerParams(
                dimension_semantics=dims, **cparams),
            cost_estimate=pl.CostEstimate(
                flops=flops, transcendentals=0, bytes_accessed=bytes_accessed),
        )(x2d, w_eff, b2d)
    else:
        # Fused in-kernel LoRA: A_q|A_v concatenated along rank; B packed into a
        # (2r, 3C) block matrix so the middle k columns get exact zeros.
        a_cat = jnp.concatenate([w_a_q, w_a_v], axis=1).astype(compute_dtype)
        b_pack = jnp.zeros((2 * r, N), jnp.float32)
        b_pack = b_pack.at[:r, :C].set(w_b_q.astype(jnp.float32))
        b_pack = b_pack.at[r:, 2 * C:].set(w_b_v.astype(jnp.float32))
        b_pack = b_pack.astype(compute_dtype)
        w_c = w_qkv.astype(compute_dtype)

        flops = (2 * M_pad * C * N
                 + 2 * M_pad * C * (2 * r)
                 + 2 * M_pad * (2 * r) * N)
        bytes_accessed = (x2d.size * x2d.dtype.itemsize
                          + w_c.size * w_c.dtype.itemsize
                          + b2d.size * b2d.dtype.itemsize
                          + a_cat.size * a_cat.dtype.itemsize
                          + b_pack.size * b_pack.dtype.itemsize
                          + M_pad * N * out_isize)

        # M outer / N inner so the (tm, 2r) LoRA hidden state is computed once
        # per row tile (pl.when(j == 0)) and reused across the N sweep.
        grid = (num_m, num_n)
        dims = ("parallel", "arbitrary")
        x_spec = _bspec((tm, C), lambda i, j: (i, 0))
        w_spec = _bspec((C, tn), lambda i, j: (0, j), buffers=1)
        b_spec = _bspec((1, tn), lambda i, j: (0, j), buffers=1)
        a_spec = _bspec((C, 2 * r), lambda i, j: (0, 0), buffers=1)
        p_spec = _bspec((2 * r, tn), lambda i, j: (0, j), buffers=1)
        o_spec = _bspec((tm, tn), lambda i, j: (i, j))

        out2d = pl.pallas_call(
            _qkv_lora_fused_kernel,
            out_shape=jax.ShapeDtypeStruct((M_pad, N), out_dtype),
            grid_spec=pltpu.PrefetchScalarGridSpec(
                num_scalar_prefetch=0, grid=grid,
                in_specs=[x_spec, w_spec, b_spec, a_spec, p_spec],
                out_specs=o_spec,
                scratch_shapes=[pltpu.VMEM((tm, 2 * r), jnp.float32)]),
            compiler_params=pltpu.CompilerParams(
                dimension_semantics=dims, **cparams),
            cost_estimate=pl.CostEstimate(
                flops=flops, transcendentals=0, bytes_accessed=bytes_accessed),
        )(x2d, w_c, b2d, a_cat, b_pack)

    return out2d[:M].reshape(B, H, W, N)


def lora_qkv_ref(x, w_qkv, b_qkv, w_a_q, w_b_q, w_a_v, w_b_v):
    """Pure-JAX f32 reference with the same semantics as the PyTorch module."""
    hp = jax.lax.Precision.HIGHEST
    qkv = jnp.einsum("bhwc,cd->bhwd", x, w_qkv, precision=hp) + b_qkv
    new_q = jnp.einsum("bhwc,cr,rd->bhwd", x, w_a_q, w_b_q, precision=hp)
    new_v = jnp.einsum("bhwc,cr,rd->bhwd", x, w_a_v, w_b_v, precision=hp)
    C = x.shape[-1]
    qkv = qkv.at[..., :C].add(new_q)
    qkv = qkv.at[..., -C:].add(new_v)
    return qkv


if __name__ == "__main__":
    key = jax.random.PRNGKey(0)
    ks = jax.random.split(key, 6)

    def make_params(k, C, r):
        kk = jax.random.split(k, 6)
        w_qkv = jax.random.normal(kk[0], (C, 3 * C), jnp.float32) * 0.05
        b_qkv = jax.random.normal(kk[1], (3 * C,), jnp.float32) * 0.05
        w_a_q = jax.random.normal(kk[2], (C, r), jnp.float32) * 0.05
        w_b_q = jax.random.normal(kk[3], (r, C), jnp.float32) * 0.05
        w_a_v = jax.random.normal(kk[4], (C, r), jnp.float32) * 0.05
        w_b_v = jax.random.normal(kk[5], (r, C), jnp.float32) * 0.05
        return w_qkv, b_qkv, w_a_q, w_b_q, w_a_v, w_b_v

    # --- Case 1: small SAM-like block: C=32, r=4, tokens 2x8x8 ---------------
    B, H, W, C, r = 2, 8, 8, 32, 4
    params = make_params(ks[0], C, r)
    w_qkv, b_qkv, w_a_q, w_b_q, w_a_v, w_b_v = params
    x = jax.random.normal(ks[1], (B, H, W, C), jnp.float32)
    ref = lora_qkv_ref(x, *params)

    # One-time fold at "weight-load time" (f32 fold, single cast).
    w_eff = fold_lora_weights(w_qkv, w_a_q, w_b_q, w_a_v, w_b_v, dtype=jnp.float32)

    # Folded path, f32 compute (correctness check).
    out_f32 = lora_qkv(x, *params, w_eff=w_eff, fold_lora=True,
                       compute_dtype=jnp.float32)
    out_f32 = jax.block_until_ready(out_f32)
    assert out_f32.shape == (B, H, W, 3 * C)
    assert jnp.allclose(out_f32, ref, atol=1e-2, rtol=1e-2)

    # Fused in-kernel LoRA path, f32 compute.
    out_fused = lora_qkv(x, *params, fold_lora=False, compute_dtype=jnp.float32)
    out_fused = jax.block_until_ready(out_fused)
    assert jnp.allclose(out_fused, ref, atol=1e-2, rtol=1e-2)

    # Default bf16 MXU path (f32 accumulation); looser tolerance vs f32 ref.
    out_bf16 = lora_qkv(x, *params, w_eff=w_eff, fold_lora=True)
    out_bf16 = jax.block_until_ready(out_bf16)
    assert out_bf16.dtype == jnp.bfloat16
    assert jnp.allclose(out_bf16.astype(jnp.float32), ref, atol=5e-2, rtol=5e-2)

    # Ragged token count (M = 35): exercises the balanced-tile padding path.
    x2 = jax.random.normal(ks[2], (1, 5, 7, C), jnp.float32)
    ref2 = lora_qkv_ref(x2, *params)
    out2 = lora_qkv(x2, *params, w_eff=w_eff, compute_dtype=jnp.float32)
    out2 = jax.block_until_ready(out2)
    assert jnp.allclose(out2, ref2, atol=1e-2, rtol=1e-2)

    # --- Case 2: C=128 so the N-tiled path (tn=128 < 3C) is exercised --------
    C2, r2 = 128, 4
    params2 = make_params(ks[3], C2, r2)
    x3 = jax.random.normal(ks[4], (1, 4, 4, C2), jnp.float32)
    ref3 = lora_qkv_ref(x3, *params2)

    out3 = lora_qkv(x3, *params2, fold_lora=True, tn=128, compute_dtype=jnp.float32)
    out3 = jax.block_until_ready(out3)
    assert jnp.allclose(out3, ref3, atol=1e-2, rtol=1e-2)

    out4 = lora_qkv(x3, *params2, fold_lora=False, tn=128, compute_dtype=jnp.float32)
    out4 = jax.block_until_ready(out4)
    assert jnp.allclose(out4, ref3, atol=1e-2, rtol=1e-2)

    print("KERNEL_OK")
</pallas_src>

<mosaic_0001>
module attributes {stable_mosaic.version = 11 : i64} {
  func.func @_qkv_folded_kernel(%arg0: i32, %arg1: memref<128x32xf32, #tpu.memory_space<vmem>>, %arg2: memref<32x96xf32, #tpu.memory_space<vmem>>, %arg3: memref<1x96xf32, #tpu.memory_space<vmem>>, %arg4: memref<128x96xf32, #tpu.memory_space<vmem>>) attributes {dimension_semantics = [#tpu.dimension_semantics<parallel>], iteration_bounds = array<i64: 1>, scalar_prefetch = 0 : i64, scratch_operands = 0 : i64, tpu.core_type = #tpu.core_type<tc>, window_params = [{transform_indices = @transform_0, window_bounds = array<i64: 128, 32>}, {pipeline_mode = #tpu.pipeline_mode<synchronous>, transform_indices = @transform_1, window_bounds = array<i64: 32, 96>}, {pipeline_mode = #tpu.pipeline_mode<synchronous>, transform_indices = @transform_2, window_bounds = array<i64: 1, 96>}, {transform_indices = @transform_3, window_bounds = array<i64: 128, 96>}]} {
    %c0 = arith.constant 0 : index
    %c0_0 = arith.constant 0 : index
    %0 = vector.load %arg1[%c0, %c0_0] : memref<128x32xf32, #tpu.memory_space<vmem>>, vector<128x32xf32>
    %c0_1 = arith.constant 0 : index
    %c0_2 = arith.constant 0 : index
    %1 = vector.load %arg2[%c0_1, %c0_2] : memref<32x96xf32, #tpu.memory_space<vmem>>, vector<32x96xf32>
    %cst = arith.constant dense<0.000000e+00> : vector<128x96xf32>
    %2 = tpu.matmul %0, %1, %cst {dimension_numbers = #tpu.dot_dimension_numbers<[1], [0], [0], [1], [0, 0, 1, 1], [], []>} : vector<128x32xf32>, vector<32x96xf32>, vector<128x96xf32> -> vector<128x96xf32>
    %c0_3 = arith.constant 0 : index
    %c0_4 = arith.constant 0 : index
    %3 = vector.load %arg3[%c0_3, %c0_4] : memref<1x96xf32, #tpu.memory_space<vmem>>, vector<1x96xf32>
    %4 = vector.broadcast %3 : vector<1x96xf32> to vector<128x96xf32>
    %5 = arith.addf %2, %4 : vector<128x96xf32>
    %c0_5 = arith.constant 0 : index
    %c0_6 = arith.constant 0 : index
    %6 = vector.load %arg4[%c0_5, %c0_6] : memref<128x96xf32, #tpu.memory_space<vmem>>, vector<128x96xf32>
    tpu.vector_store %arg4[%c0_5, %c0_6], %5 {strides = array<i32>} : memref<128x96xf32, #tpu.memory_space<vmem>>, vector<128x96xf32>,
    return
  }
  func.func @transform_0(%arg0: i32) -> (i32, i32) {
    %c0_i32 = arith.constant 0 : i32
    %c0_i32_0 = arith.constant 0 : i32
    return %arg0, %c0_i32 : i32, i32
  }
  func.func @transform_1(%arg0: i32) -> (i32, i32) {
    %c0_i32 = arith.constant 0 : i32
    %c0_i32_0 = arith.constant 0 : i32
    %c0_i32_1 = arith.constant 0 : i32
    return %c0_i32, %c0_i32_0 : i32, i32
  }
  func.func @transform_2(%arg0: i32) -> (i32, i32) {
    %c0_i32 = arith.constant 0 : i32
    %c0_i32_0 = arith.constant 0 : i32
    %c0_i32_1 = arith.constant 0 : i32
    return %c0_i32, %c0_i32_0 : i32, i32
  }
  func.func @transform_3(%arg0: i32) -> (i32, i32) {
    %c0_i32 = arith.constant 0 : i32
    %c0_i32_0 = arith.constant 0 : i32
    return %arg0, %c0_i32 : i32, i32
  }
}

</mosaic_0001>

<llo_original>
// kernel: tpu_custom_call.1
$region0: #{tpu_custom_call.1}
  #allocation0 [shape = 'u32[]', space=smem, size = 0x4, offset = 0x4, fixed_abs, tag = 'smem constant byte address 0x4 - core index']
  #allocation1 [shape = 'u32[144,128]{1,0:T(1,128)}', space=vmem, size = 0x12000, scoped, tag = 'internal scratch']
  %s0 = inlined_call_operand.vmem [shape: f32[128,32], index: 0, kind: input, shape index: {}]
  %s1 = inlined_call_operand.vmem [shape: f32[32,96], index: 1, kind: input, shape index: {}]
  %s2 = inlined_call_operand.vmem [shape: f32[1,96], index: 2, kind: input, shape index: {}]
  %s3 = inlined_call_operand.vmem [shape: f32[128,96], index: 3, kind: output, shape index: {}]
  %s4 = sld [smem:[#allocation0]]
  $region22: #{tpu_custom_call.1} parent=0
    _
  %s6 = ssub.s32 1, %s4
  %s7 = scalar_select 0, %s6, %s4
  // Predicated region
  $region2: #{tpu_custom_call.1} parent=0 // pred_check
    _
  $region3: #{tpu_custom_call.1} parent=0 // pred_check_branch
    %9 = sbr.rel (0) target = $region5
  $region4: #{tpu_custom_call.1} parent=0 // pred_region
    _
  $region5: #{tpu_custom_call.1} parent=0 // pred_fallthru
    _
  // Predicated region
  $region6: #{tpu_custom_call.1} parent=0 // pred_check
    _
  $region7: #{tpu_custom_call.1} parent=0 // pred_check_branch
    %11 = sbr.rel (0) target = $region9
  $region8: #{tpu_custom_call.1} parent=0 // pred_region
    _
  $region9: #{tpu_custom_call.1} parent=0 // pred_fallthru
    _
  // Predicated region
  $region10: #{tpu_custom_call.1} parent=0 // pred_check
    _
  $region11: #{tpu_custom_call.1} parent=0 // pred_check_branch
    %13 = sbr.rel (0) target = $region13
  $region12: #{tpu_custom_call.1} parent=0 // pred_region
    _
  $region13: #{tpu_custom_call.1} parent=0 // pred_fallthru
    _
  %v14 = vld [vmem:[%s0] sm:$0xff]
  %v15 = vld [vmem:[%s0 + $0x8] sm:$0xff]
  %v16 = vld [vmem:[%s0 + $0x10] sm:$0xff]
  %v17 = vld [vmem:[%s0 + $0x18] sm:$0xff]
  %v18 = vld [vmem:[%s0 + $0x20] sm:$0xff]
  %v19 = vld [vmem:[%s0 + $0x28] sm:$0xff]
  %v20 = vld [vmem:[%s0 + $0x30] sm:$0xff]
  %v21 = vld [vmem:[%s0 + $0x38] sm:$0xff]
  %v22 = vld [vmem:[%s0 + $0x40] sm:$0xff]
  %v23 = vld [vmem:[%s0 + $0x48] sm:$0xff]
  %v24 = vld [vmem:[%s0 + $0x50] sm:$0xff]
  %v25 = vld [vmem:[%s0 + $0x58] sm:$0xff]
  %v26 = vld [vmem:[%s0 + $0x60] sm:$0xff]
  %v27 = vld [vmem:[%s0 + $0x68] sm:$0xff]
  %v28 = vld [vmem:[%s0 + $0x70] sm:$0xff]
  %v29 = vld [vmem:[%s0 + $0x78] sm:$0xff]
  %v30 = vld [vmem:[%s1] sm:$0xff]
  %v31 = vld [vmem:[%s1 + $0x8] sm:$0xff]
  %v32 = vld [vmem:[%s1 + $0x10] sm:$0xff]
  %v33 = vld [vmem:[%s1 + $0x18] sm:$0xff]
  %v34 = vld [vmem:[%s2] sm:$0x1]
  %v36 = vlaneseq
  %v37 = vshrl.u32 %v36, 7
  %v38 = vsub.s32 0, %v37
  %v39 = vrot.slane %v34, %v38
  %vm41 = vcmask 261120
  %v43 = vsel %vm41, %v14, 0
  %v46 = vsel %vm41, %v15, 0
  %v49 = vsel %vm41, %v16, 0
  %v52 = vsel %vm41, %v17, 0
  %v55 = vsel %vm41, %v18, 0
  %v58 = vsel %vm41, %v19, 0
  %v61 = vsel %vm41, %v20, 0
  %v64 = vsel %vm41, %v21, 0
  %v67 = vsel %vm41, %v22, 0
  %v70 = vsel %vm41, %v23, 0
  %v73 = vsel %vm41, %v24, 0
  %v76 = vsel %vm41, %v25, 0
  %v79 = vsel %vm41, %v26, 0
  %v82 = vsel %vm41, %v27, 0
  %v85 = vsel %vm41, %v28, 0
  %v88 = vsel %vm41, %v29, 0
  %90 = vmatprep.subr.mxu0 0.0
  %91 = vmatpush1.msra.mxu0 0.0
  %92 = vmatprep.subr.mxu0 0.0
  %93 = vmatpush1.msra.mxu0 0.0
  %94 = vmatprep.subr.mxu0 0.0
  %95 = vmatpush1.msra.mxu0 0.0
  %96 = vmatprep.subr.mxu0 0.0
  %97 = vmatpush1.msra.mxu0 0.0
  %98 = vmatprep.subr.mxu0 0.0
  %99 = vmatpush1.msra.mxu0 0.0
  %100 = vmatprep.subr.mxu0 0.0
  %101 = vmatpush1.msra.mxu0 0.0
  %102 = vmatprep.subr.mxu0 0.0
  %103 = vmatpush1.msra.mxu0 0.0
  %104 = vmatprep.subr.mxu0 0.0
  %105 = vmatpush1.msra.mxu0 0.0
  %106 = vmatprep.subr.mxu0 0.0
  %107 = vmatpush1.msra.mxu0 0.0
  %108 = vmatprep.subr.mxu0 0.0
  %109 = vmatpush1.msra.mxu0 0.0
  %110 = vmatprep.subr.mxu0 0.0
  %111 = vmatpush1.msra.mxu0 0.0
  %112 = vmatprep.subr.mxu0 0.0
  %113 = vmatpush1.msra.mxu0 0.0
  %114 = vmatprep.subr.mxu0 0.0
  %115 = vmatpush1.msra.mxu0 %v33
  %116 = vmatprep.subr.mxu0 0.0
  %117 = vmatpush1.msra.mxu0 %v32
  %118 = vmatprep.subr.mxu0 0.0
  %119 = vmatpush1.msra.mxu0 %v31
  %120 = vmatprep.subr.mxu0 0.0
  %121 = vmatpush1.msra.mxu0 %v30
  %122 = vmatprep.subr.mxu0 0.0
  %123 = vmatpush2.msra.mxu0 0.0
  %124 = vmatprep.subr.mxu0 0.0
  %125 = vmatpush2.msra.mxu0 0.0
  %126 = vmatprep.subr.mxu0 0.0
  %127 = vmatpush2.msra.mxu0 0.0
  %128 = vmatprep.subr.mxu0 0.0
  %129 = vmatpush2.msra.mxu0 0.0
  %130 = vmatprep.subr.mxu0 0.0
  %131 = vmatpush2.msra.mxu0 0.0
  %132 = vmatprep.subr.mxu0 0.0
  %133 = vmatpush2.msra.mxu0 0.0
  %134 = vmatprep.subr.mxu0 0.0
  %135 = vmatpush2.msra.mxu0 0.0
  %136 = vmatprep.subr.mxu0 0.0
  %137 = vmatpush2.msra.mxu0 0.0
  %138 = vmatprep.subr.mxu0 0.0
  %139 = vmatpush2.msra.mxu0 0.0
  %140 = vmatprep.subr.mxu0 0.0
  %141 = vmatpush2.msra.mxu0 0.0
  %142 = vmatprep.subr.mxu0 0.0
  %143 = vmatpush2.msra.mxu0 0.0
  %144 = vmatprep.subr.mxu0 0.0
  %145 = vmatpush2.msra.mxu0 0.0
  %146 = vmatprep.subr.mxu0 0.0
  %147 = vmatpush2.msra.mxu0 0.0
  %148 = vmatprep.subr.mxu0 0.0
  %149 = vmatpush2.msra.mxu0 0.0
  %150 = vmatprep.subr.mxu0 0.0
  %151 = vmatpush2.msra.mxu0 0.0
  %152 = vmatprep.subr.mxu0 0.0
  %153 = vmatpush2.msra.mxu0 0.0
  %154 = vmatprep.mubr.f32.mxu0 0.0
  %155 = vmatmul.mubr.f32.gmra.mxu0 %v43
  %v156 = vpop.f32.mrf.mxu0
  %v157 = vadd.f32 %v39, %v156
  %v158 = vpop.f32.mrf.mxu0
  %159 = vmatprep.mubr.f32.mxu0 0.0
  %160 = vmatmul.mubr.f32.gmra.mxu0 %v46
  %v161 = vpop.f32.mrf.mxu0
  %v162 = vadd.f32 %v39, %v161
  %v163 = vpop.f32.mrf.mxu0
  %164 = vmatprep.mubr.f32.mxu0 0.0
  %165 = vmatmul.mubr.f32.gmra.mxu0 %v49
  %v166 = vpop.f32.mrf.mxu0
  %v167 = vadd.f32 %v39, %v166
  %v168 = vpop.f32.mrf.mxu0
  %169 = vmatprep.mubr.f32.mxu0 0.0
  %170 = vmatmul.mubr.f32.gmra.mxu0 %v52
  %v171 = vpop.f32.mrf.mxu0
  %v172 = vadd.f32 %v39, %v171
  %v173 = vpop.f32.mrf.mxu0
  %174 = vmatprep.mubr.f32.mxu0 0.0
  %175 = vmatmul.mubr.f32.gmra.mxu0 %v55
  %v176 = vpop.f32.mrf.mxu0
  %v177 = vadd.f32 %v39, %v176
  %v178 = vpop.f32.mrf.mxu0
  %179 = vmatprep.mubr.f32.mxu0 0.0
  %180 = vmatmul.mubr.f32.gmra.mxu0 %v58
  %v181 = vpop.f32.mrf.mxu0
  %v182 = vadd.f32 %v39, %v181
  %v183 = vpop.f32.mrf.mxu0
  %184 = vmatprep.mubr.f32.mxu0 0.0
  %185 = vmatmul.mubr.f32.gmra.mxu0 %v61
  %v186 = vpop.f32.mrf.mxu0
  %v187 = vadd.f32 %v39, %v186
  %v188 = vpop.f32.mrf.mxu0
  %189 = vmatprep.mubr.f32.mxu0 0.0
  %190 = vmatmul.mubr.f32.gmra.mxu0 %v64
  %v191 = vpop.f32.mrf.mxu0
  %v192 = vadd.f32 %v39, %v191
  %v193 = vpop.f32.mrf.mxu0
  %194 = vmatprep.mubr.f32.mxu0 0.0
  %195 = vmatmul.mubr.f32.gmra.mxu0 %v67
  %v196 = vpop.f32.mrf.mxu0
  %v197 = vadd.f32 %v39, %v196
  %v198 = vpop.f32.mrf.mxu0
  %199 = vmatprep.mubr.f32.mxu0 0.0
  %200 = vmatmul.mubr.f32.gmra.mxu0 %v70
  %v201 = vpop.f32.mrf.mxu0
  %v202 = vadd.f32 %v39, %v201
  %v203 = vpop.f32.mrf.mxu0
  %204 = vmatprep.mubr.f32.mxu0 0.0
  %205 = vmatmul.mubr.f32.gmra.mxu0 %v73
  %v206 = vpop.f32.mrf.mxu0
  %v207 = vadd.f32 %v39, %v206
  %v208 = vpop.f32.mrf.mxu0
  %209 = vmatprep.mubr.f32.mxu0 0.0
  %210 = vmatmul.mubr.f32.gmra.mxu0 %v76
  %v211 = vpop.f32.mrf.mxu0
  %v212 = vadd.f32 %v39, %v211
  %v213 = vpop.f32.mrf.mxu0
  %214 = vmatprep.mubr.f32.mxu0 0.0
  %215 = vmatmul.mubr.f32.gmra.mxu0 %v79
  %v216 = vpop.f32.mrf.mxu0
  %v217 = vadd.f32 %v39, %v216
  %v218 = vpop.f32.mrf.mxu0
  %219 = vmatprep.mubr.f32.mxu0 0.0
  %220 = vmatmul.mubr.f32.gmra.mxu0 %v82
  %v221 = vpop.f32.mrf.mxu0
  %v222 = vadd.f32 %v39, %v221
  %v223 = vpop.f32.mrf.mxu0
  %224 = vmatprep.mubr.f32.mxu0 0.0
  %225 = vmatmul.mubr.f32.gmra.mxu0 %v85
  %v226 = vpop.f32.mrf.mxu0
  %v227 = vadd.f32 %v39, %v226
  %v228 = vpop.f32.mrf.mxu0
  %229 = vmatprep.mubr.f32.mxu0 0.0
  %230 = vmatmul.mubr.f32.gmra.mxu0 %v88
  %v231 = vpop.f32.mrf.mxu0
  %v232 = vadd.f32 %v39, %v231
  %v233 = vpop.f32.mrf.mxu0
  %234 = vdwg.mxu0
  %vm235 = vcmask 785408
  %236 = vst.msk [vmem:[%s3] sm:$0xff] %vm235, %v157
  %237 = vst.msk [vmem:[%s3 + $0x8] sm:$0xff] %vm235, %v162
  %238 = vst.msk [vmem:[%s3 + $0x10] sm:$0xff] %vm235, %v167
  %239 = vst.msk [vmem:[%s3 + $0x18] sm:$0xff] %vm235, %v172
  %240 = vst.msk [vmem:[%s3 + $0x20] sm:$0xff] %vm235, %v177
  %241 = vst.msk [vmem:[%s3 + $0x28] sm:$0xff] %vm235, %v182
  %242 = vst.msk [vmem:[%s3 + $0x30] sm:$0xff] %vm235, %v187
  %243 = vst.msk [vmem:[%s3 + $0x38] sm:$0xff] %vm235, %v192
  %244 = vst.msk [vmem:[%s3 + $0x40] sm:$0xff] %vm235, %v197
  %245 = vst.msk [vmem:[%s3 + $0x48] sm:$0xff] %vm235, %v202
  %246 = vst.msk [vmem:[%s3 + $0x50] sm:$0xff] %vm235, %v207
  %247 = vst.msk [vmem:[%s3 + $0x58] sm:$0xff] %vm235, %v212
  %248 = vst.msk [vmem:[%s3 + $0x60] sm:$0xff] %vm235, %v217
  %249 = vst.msk [vmem:[%s3 + $0x68] sm:$0xff] %vm235, %v222
  %250 = vst.msk [vmem:[%s3 + $0x70] sm:$0xff] %vm235, %v227
  %251 = vst.msk [vmem:[%s3 + $0x78] sm:$0xff] %vm235, %v232
  // Predicated region
  $region14: #{tpu_custom_call.1} parent=0 // pred_check
    _
  $region15: #{tpu_custom_call.1} parent=0 // pred_check_branch
    %253 = sbr.rel (0) target = $region17
  $region16: #{tpu_custom_call.1} parent=0 // pred_region
    _
  $region17: #{tpu_custom_call.1} parent=0 // pred_fallthru
    _
  // Predicated region
  $region18: #{tpu_custom_call.1} parent=0 // pred_check
    _
  $region19: #{tpu_custom_call.1} parent=0 // pred_check_branch
    %255 = sbr.rel (0) target = $region21
  $region20: #{tpu_custom_call.1} parent=0 // pred_region
    _
  $region21: #{tpu_custom_call.1} parent=0 // pred_fallthru
    _

</llo_original>
